<compile_context>
chip_gen: v7x
topology: tpu7x:2x2x1
jax: 0.10.0
libtpu: 0.0.40
codegen_flags: <defaults>
</compile_context>

<pallas_src>
import jax
import jax.numpy as jnp
from jax.experimental import pallas as pl
from jax.experimental.pallas import tpu as pltpu


def _critic_kernel(x_ref, w1_ref, b1_ref, w2_ref, b2_ref, w3_ref, b3_ref, o_ref):
    # Layer 1: single K=(S+A) bf16 matmul on the MXU, f32 accumulation.
    x = x_ref[...].astype(jnp.bfloat16)
    h1 = jnp.dot(x, w1_ref[...], preferred_element_type=jnp.float32)
    h1 = jnp.maximum(h1 + b1_ref[...], 0.0)                       # ReLU (f32)

    # Layer 2: bf16 matmul on the MXU, f32 accumulation.
    h2 = jnp.dot(h1.astype(jnp.bfloat16), w2_ref[...],
                 preferred_element_type=jnp.float32)
    h2 = jnp.maximum(h2 + b2_ref[...], 0.0)                       # ReLU (f32)

    # Layer 3 (mid -> 1): VPU multiply + XLU lane reduction (no N=1 MXU pass).
    q = jnp.sum(h2 * w3_ref[...], axis=-1, keepdims=True) + b3_ref[...]
    o_ref[...] = q.astype(o_ref.dtype)                            # (tb, 1)


def _round_up(x, m):
    return ((x + m - 1) // m) * m


def _cdiv(a, b):
    return -(-a // b)


def critic_forward(state, action, params, *, block_batch=1024):
    """state: (B, state_dim), action: (B, action_dim) -> (B, 1) float32."""
    w1, b1, w2, b2, w3, b3 = params
    batch, state_dim = state.shape
    action_dim = action.shape[1]
    in_dim = state_dim + action_dim
    mid_dim = w1.shape[1]

    # Wrapper-side concat (≈ in_dim*4 bytes/row of extra HBM traffic) so the
    # kernel sees one lane-packed activation stream and W1 stays whole.
    x = jnp.concatenate((state, action), axis=1).astype(jnp.float32)

    # bf16 weights for the MXU; biases and the w3 reduce row stay f32.
    w1_bf = w1.astype(jnp.bfloat16)
    w2_bf = w2.astype(jnp.bfloat16)
    w3_row = w3.reshape(1, mid_dim).astype(jnp.float32)

    # Balanced, sublane-aligned batch tiles.  >= 2 tiles whenever the batch is
    # big enough, so the "parallel" axis can use both TCs on v7x.
    n_tiles = _cdiv(batch, block_batch)
    if batch >= 16:
        n_tiles = max(n_tiles, 2)
    tb = _round_up(_cdiv(batch, n_tiles), 8)
    padded = n_tiles * tb
    if padded != batch:
        x = jnp.pad(x, ((0, padded - batch), (0, 0)))

    def resident(shape):
        # Constant index_map -> block stays VMEM-resident across grid steps.
        return pl.BlockSpec(shape, lambda i: (0, 0))

    out = pl.pallas_call(
        _critic_kernel,
        out_shape=jax.ShapeDtypeStruct((padded, 1), jnp.float32),
        grid=(n_tiles,),
        in_specs=[
            pl.BlockSpec((tb, in_dim), lambda i: (i, 0)),          # streamed x
            resident((in_dim, mid_dim)),                           # W1 (bf16)
            resident((1, mid_dim)),                                # b1
            resident((mid_dim, mid_dim)),                          # W2 (bf16)
            resident((1, mid_dim)),                                # b2
            resident((1, mid_dim)),                                # w3 row
            resident((1, 1)),                                      # b3
        ],
        out_specs=pl.BlockSpec((tb, 1), lambda i: (i, 0)),
        compiler_params=pltpu.CompilerParams(
            dimension_semantics=("parallel",)),
    )(x, w1_bf, b1, w2_bf, b2, w3_row, b3)
    return out[:batch]


def init_critic_params(key, state_dim, action_dim, mid_dim):
    """Deterministic PyTorch-style (uniform ±1/sqrt(fan_in)) Linear init."""
    def linear(key, fan_in, fan_out):
        kw, kb = jax.random.split(key)
        bound = 1.0 / jnp.sqrt(fan_in)
        w = jax.random.uniform(kw, (fan_in, fan_out), jnp.float32, -bound, bound)
        b = jax.random.uniform(kb, (1, fan_out), jnp.float32, -bound, bound)
        return w, b

    k1, k2, k3 = jax.random.split(key, 3)
    w1, b1 = linear(k1, state_dim + action_dim, mid_dim)
    w2, b2 = linear(k2, mid_dim, mid_dim)
    w3, b3 = linear(k3, mid_dim, 1)
    return (w1, b1, w2, b2, w3, b3)


def _reference(state, action, params):
    # Pure-f32 reference matching the PyTorch module semantics.
    w1, b1, w2, b2, w3, b3 = params
    x = jnp.concatenate((state, action), axis=1)
    h1 = jnp.maximum(x @ w1 + b1, 0.0)
    h2 = jnp.maximum(h1 @ w2 + b2, 0.0)
    return h2 @ w3 + b3


if __name__ == "__main__":
    batch, state_dim, action_dim, mid_dim = 8, 12, 4, 128

    key = jax.random.PRNGKey(0)
    k_params, k_state, k_action = jax.random.split(key, 3)

    params = init_critic_params(k_params, state_dim, action_dim, mid_dim)
    state = jax.random.normal(k_state, (batch, state_dim), jnp.float32)
    action = jax.random.normal(k_action, (batch, action_dim), jnp.float32)

    q = critic_forward(state, action, params)
    q = jax.block_until_ready(q)

    q_ref = jax.block_until_ready(_reference(state, action, params))
    assert q.shape == (batch, 1)
    # bf16 matmul inputs (f32 accumulation) -> loosened tolerance vs. f32 ref.
    assert jnp.allclose(q, q_ref, atol=5e-2, rtol=5e-2)

    print("KERNEL_OK")
</pallas_src>

<mosaic_0001>
module attributes {stable_mosaic.version = 11 : i64} {
  func.func @_critic_kernel(%arg0: i32, %arg1: memref<8x16xf32, #tpu.memory_space<vmem>>, %arg2: memref<16x128xbf16, #tpu.memory_space<vmem>>, %arg3: memref<1x128xf32, #tpu.memory_space<vmem>>, %arg4: memref<128x128xbf16, #tpu.memory_space<vmem>>, %arg5: memref<1x128xf32, #tpu.memory_space<vmem>>, %arg6: memref<1x128xf32, #tpu.memory_space<vmem>>, %arg7: memref<1x1xf32, #tpu.memory_space<vmem>>, %arg8: memref<8x1xf32, #tpu.memory_space<vmem>>) attributes {dimension_semantics = [#tpu.dimension_semantics<parallel>], iteration_bounds = array<i64: 1>, scalar_prefetch = 0 : i64, scratch_operands = 0 : i64, tpu.core_type = #tpu.core_type<tc>, window_params = [{transform_indices = @transform_0, window_bounds = array<i64: 8, 16>}, {pipeline_mode = #tpu.pipeline_mode<synchronous>, transform_indices = @transform_1, window_bounds = array<i64: 16, 128>}, {pipeline_mode = #tpu.pipeline_mode<synchronous>, transform_indices = @transform_2, window_bounds = array<i64: 1, 128>}, {pipeline_mode = #tpu.pipeline_mode<synchronous>, transform_indices = @transform_3, window_bounds = array<i64: 128, 128>}, {pipeline_mode = #tpu.pipeline_mode<synchronous>, transform_indices = @transform_4, window_bounds = array<i64: 1, 128>}, {pipeline_mode = #tpu.pipeline_mode<synchronous>, transform_indices = @transform_5, window_bounds = array<i64: 1, 128>}, {pipeline_mode = #tpu.pipeline_mode<synchronous>, transform_indices = @transform_6, window_bounds = array<i64: 1, 1>}, {transform_indices = @transform_7, window_bounds = array<i64: 8, 1>}]} {
    %c0 = arith.constant 0 : index
    %c0_0 = arith.constant 0 : index
    %0 = vector.load %arg1[%c0, %c0_0] : memref<8x16xf32, #tpu.memory_space<vmem>>, vector<8x16xf32>
    %1 = arith.truncf %0 : vector<8x16xf32> to vector<8x16xbf16>
    %c0_1 = arith.constant 0 : index
    %c0_2 = arith.constant 0 : index
    %2 = vector.load %arg2[%c0_1, %c0_2] : memref<16x128xbf16, #tpu.memory_space<vmem>>, vector<16x128xbf16>
    %cst = arith.constant dense<0.000000e+00> : vector<8x128xf32>
    %3 = tpu.matmul %1, %2, %cst {dimension_numbers = #tpu.dot_dimension_numbers<[1], [0], [0], [1], [0, 0, 1, 1], [], []>} : vector<8x16xbf16>, vector<16x128xbf16>, vector<8x128xf32> -> vector<8x128xf32>
    %c0_3 = arith.constant 0 : index
    %c0_4 = arith.constant 0 : index
    %4 = vector.load %arg3[%c0_3, %c0_4] : memref<1x128xf32, #tpu.memory_space<vmem>>, vector<1x128xf32>
    %5 = vector.broadcast %4 : vector<1x128xf32> to vector<8x128xf32>
    %6 = arith.addf %3, %5 : vector<8x128xf32>
    %cst_5 = arith.constant 0.000000e+00 : f32
    %7 = vector.broadcast %cst_5 : f32 to vector<8x128xf32>
    %8 = arith.maximumf %6, %7 : vector<8x128xf32>
    %9 = arith.truncf %8 : vector<8x128xf32> to vector<8x128xbf16>
    %c0_6 = arith.constant 0 : index
    %c0_7 = arith.constant 0 : index
    %10 = vector.load %arg4[%c0_6, %c0_7] : memref<128x128xbf16, #tpu.memory_space<vmem>>, vector<128x128xbf16>
    %cst_8 = arith.constant dense<0.000000e+00> : vector<8x128xf32>
    %11 = tpu.matmul %9, %10, %cst_8 {dimension_numbers = #tpu.dot_dimension_numbers<[1], [0], [0], [1], [0, 0, 1, 1], [], []>} : vector<8x128xbf16>, vector<128x128xbf16>, vector<8x128xf32> -> vector<8x128xf32>
    %c0_9 = arith.constant 0 : index
    %c0_10 = arith.constant 0 : index
    %12 = vector.load %arg5[%c0_9, %c0_10] : memref<1x128xf32, #tpu.memory_space<vmem>>, vector<1x128xf32>
    %13 = vector.broadcast %12 : vector<1x128xf32> to vector<8x128xf32>
    %14 = arith.addf %11, %13 : vector<8x128xf32>
    %cst_11 = arith.constant 0.000000e+00 : f32
    %15 = vector.broadcast %cst_11 : f32 to vector<8x128xf32>
    %16 = arith.maximumf %14, %15 : vector<8x128xf32>
    %c0_12 = arith.constant 0 : index
    %c0_13 = arith.constant 0 : index
    %17 = vector.load %arg6[%c0_12, %c0_13] : memref<1x128xf32, #tpu.memory_space<vmem>>, vector<1x128xf32>
    %18 = vector.broadcast %17 : vector<1x128xf32> to vector<8x128xf32>
    %19 = arith.mulf %16, %18 : vector<8x128xf32>
    %cst_14 = arith.constant dense<0.000000e+00> : vector<8xf32>
    %20 = vector.multi_reduction <add>, %19, %cst_14 [1] : vector<8x128xf32> to vector<8xf32>
    %21 = vector.shape_cast %20 : vector<8xf32> to vector<8x1xf32>
    %c0_15 = arith.constant 0 : index
    %c0_16 = arith.constant 0 : index
    %22 = vector.load %arg7[%c0_15, %c0_16] : memref<1x1xf32, #tpu.memory_space<vmem>>, vector<1x1xf32>
    %23 = vector.broadcast %22 : vector<1x1xf32> to vector<8x1xf32>
    %24 = arith.addf %21, %23 : vector<8x1xf32>
    %c0_17 = arith.constant 0 : index
    %c0_18 = arith.constant 0 : index
    %25 = vector.load %arg8[%c0_17, %c0_18] : memref<8x1xf32, #tpu.memory_space<vmem>>, vector<8x1xf32>
    tpu.vector_store %arg8[%c0_17, %c0_18], %24 {strides = array<i32>} : memref<8x1xf32, #tpu.memory_space<vmem>>, vector<8x1xf32>,
    return
  }
  func.func @transform_0(%arg0: i32) -> (i32, i32) {
    %c0_i32 = arith.constant 0 : i32
    %c0_i32_0 = arith.constant 0 : i32
    return %arg0, %c0_i32 : i32, i32
  }
  func.func @transform_1(%arg0: i32) -> (i32, i32) {
    %c0_i32 = arith.constant 0 : i32
    %c0_i32_0 = arith.constant 0 : i32
    %c0_i32_1 = arith.constant 0 : i32
    return %c0_i32, %c0_i32_0 : i32, i32
  }
  func.func @transform_2(%arg0: i32) -> (i32, i32) {
    %c0_i32 = arith.constant 0 : i32
    %c0_i32_0 = arith.constant 0 : i32
    %c0_i32_1 = arith.constant 0 : i32
    return %c0_i32, %c0_i32_0 : i32, i32
  }
  func.func @transform_3(%arg0: i32) -> (i32, i32) {
    %c0_i32 = arith.constant 0 : i32
    %c0_i32_0 = arith.constant 0 : i32
    %c0_i32_1 = arith.constant 0 : i32
    return %c0_i32, %c0_i32_0 : i32, i32
  }
  func.func @transform_4(%arg0: i32) -> (i32, i32) {
    %c0_i32 = arith.constant 0 : i32
    %c0_i32_0 = arith.constant 0 : i32
    %c0_i32_1 = arith.constant 0 : i32
    return %c0_i32, %c0_i32_0 : i32, i32
  }
  func.func @transform_5(%arg0: i32) -> (i32, i32) {
    %c0_i32 = arith.constant 0 : i32
    %c0_i32_0 = arith.constant 0 : i32
    %c0_i32_1 = arith.constant 0 : i32
    return %c0_i32, %c0_i32_0 : i32, i32
  }
  func.func @transform_6(%arg0: i32) -> (i32, i32) {
    %c0_i32 = arith.constant 0 : i32
    %c0_i32_0 = arith.constant 0 : i32
    %c0_i32_1 = arith.constant 0 : i32
    return %c0_i32, %c0_i32_0 : i32, i32
  }
  func.func @transform_7(%arg0: i32) -> (i32, i32) {
    %c0_i32 = arith.constant 0 : i32
    %c0_i32_0 = arith.constant 0 : i32
    return %arg0, %c0_i32 : i32, i32
  }
}

</mosaic_0001>

<llo_original>
// kernel: tpu_custom_call.1
$region0: #{tpu_custom_call.1}
  #allocation0 [shape = 'u32[]', space=smem, size = 0x4, offset = 0x4, fixed_abs, tag = 'smem constant byte address 0x4 - core index']
  #allocation1 [shape = 'u32[144,128]{1,0:T(1,128)}', space=vmem, size = 0x12000, scoped, tag = 'internal scratch']
  #allocation2 [shape = 'f32[1,1]{1,0:T(1,128)S(1)}', space=vmem, size = 0x200, scoped, tag = 'scoped memory for tpu_custom_call.1']
  %s0 = inlined_call_operand.hbm [shape: f32[8,16], index: 0, kind: input, shape index: {}]
  %s1 = inlined_call_operand.hbm [shape: bf16[16,128], index: 1, kind: input, shape index: {}]
  %s2 = inlined_call_operand.vmem [shape: f32[1,128], index: 2, kind: input, shape index: {}]
  %s3 = inlined_call_operand.hbm [shape: bf16[128,128], index: 3, kind: input, shape index: {}]
  %s4 = inlined_call_operand.vmem [shape: f32[1,128], index: 4, kind: input, shape index: {}]
  %s5 = inlined_call_operand.vmem [shape: f32[1,128], index: 5, kind: input, shape index: {}]
  %s6 = inlined_call_operand.<no memory space> [shape: f32[1,1], index: 6, kind: input, shape index: {}]
  %s7 = inlined_call_operand.vmem [shape: f32[8,1], index: 7, kind: output, shape index: {}]
  %s8 = sld [smem:[#allocation0]]
  $region50: #{tpu_custom_call.1} parent=0
    _
  %s10 = ssub.s32 1, %s8
  %s11 = scalar_select 0, %s10, %s8
  %v12 = vstv %s6
  %13 = vst [vmem:[#allocation2] sm:$0x1] %v12
  $region1: #{tpu_custom_call.1} parent=0
    #allocation3 [shape = 'u8[4096]{0}', space=vmem, size = 0x1000, scoped, tag = 'input window, operand 0, single buffered']
    #allocation4 [shape = 's32[1]{0}', space=sflag, size = 0x4, scoped, tag = 'scoped memory for tpu_custom_call.1']
    #allocation5 [shape = 'u8[4096]{0}', space=vmem, size = 0x1000, scoped, tag = 'input window, operand 1, single buffered']
    #allocation6 [shape = 's32[1]{0}', space=sflag, size = 0x4, scoped, tag = 'scoped memory for tpu_custom_call.1']
    #allocation7 [shape = 'u8[32768]{0}', space=vmem, size = 0x8000, scoped, tag = 'input window, operand 3, single buffered']
    %14 = vsyncpa [#allocation4], 0
    %15 = vsyncpa [#allocation6], 0
    // Predicated region
    $region2: #{tpu_custom_call.1} parent=1 // pred_check
      _
    $region3: #{tpu_custom_call.1} parent=1 // pred_check_branch
      %17 = sbr.rel (0) target = $region5
    $region4: #{tpu_custom_call.1} parent=1 // pred_region
      %s19 = ssub.s32 128, 128
      %20 = vsyncadd [#allocation4], %s19
      %s22 = sshll.u32 [#allocation3], 4
      %s23 = int_to_ptr.vmem [resolvable:$true] %s22
      %25 = dma.hbm_to_vmem [thread:$0]  %s0, 128, %s23, [#allocation4]
    $region5: #{tpu_custom_call.1} parent=1 // pred_fallthru
      _
    // Predicated region
    $region6: #{tpu_custom_call.1} parent=1 // pred_check
      _
    $region7: #{tpu_custom_call.1} parent=1 // pred_check_branch
      %27 = sbr.rel (0) target = $region9
    $region8: #{tpu_custom_call.1} parent=1 // pred_region
      %s29 = ssub.s32 128, 128
      %30 = vsyncadd [#allocation6], %s29
      %s31 = sshll.u32 [#allocation5], 4
      %s32 = int_to_ptr.vmem [resolvable:$true] %s31
      %37 = dma.hbm_to_vmem [thread:$0]  %s1, 128, %s32, [#allocation6], 64, 64, 4
    $region9: #{tpu_custom_call.1} parent=1 // pred_fallthru
      _
    // Predicated region
    $region10: #{tpu_custom_call.1} parent=1 // pred_check
      _
    $region11: #{tpu_custom_call.1} parent=1 // pred_check_branch
      %39 = sbr.rel (0) target = $region13
    $region12: #{tpu_custom_call.1} parent=1 // pred_region
      _
    $region13: #{tpu_custom_call.1} parent=1 // pred_fallthru
      _
    // Predicated region
    $region14: #{tpu_custom_call.1} parent=1 // pred_check
      _
    $region15: #{tpu_custom_call.1} parent=1 // pred_check_branch
      %41 = sbr.rel (0) target = $region17
    $region16: #{tpu_custom_call.1} parent=1 // pred_region
      %s43 = ssub.s32 1024, 1024
      %44 = vsyncadd [#allocation6], %s43
      %s45 = sshll.u32 [#allocation7], 4
      %s46 = int_to_ptr.vmem [resolvable:$true] %s45
      %51 = dma.hbm_to_vmem [thread:$0]  %s3, 1024, %s46, [#allocation6], 64, 64, 4
    $region17: #{tpu_custom_call.1} parent=1 // pred_fallthru
      _
    // Predicated region
    $region18: #{tpu_custom_call.1} parent=1 // pred_check
      _
    $region19: #{tpu_custom_call.1} parent=1 // pred_check_branch
      %53 = sbr.rel (0) target = $region21
    $region20: #{tpu_custom_call.1} parent=1 // pred_region
      _
    $region21: #{tpu_custom_call.1} parent=1 // pred_fallthru
      _
    // Predicated region
    $region22: #{tpu_custom_call.1} parent=1 // pred_check
      _
    $region23: #{tpu_custom_call.1} parent=1 // pred_check_branch
      %55 = sbr.rel (0) target = $region25
    $region24: #{tpu_custom_call.1} parent=1 // pred_region
      _
    $region25: #{tpu_custom_call.1} parent=1 // pred_fallthru
      _
    // Predicated region
    $region26: #{tpu_custom_call.1} parent=1 // pred_check
      _
    $region27: #{tpu_custom_call.1} parent=1 // pred_check_branch
      %57 = sbr.rel (0) target = $region29
    $region28: #{tpu_custom_call.1} parent=1 // pred_region
      _
    $region29: #{tpu_custom_call.1} parent=1 // pred_fallthru
      _
    // Predicated region
    $region30: #{tpu_custom_call.1} parent=1 // pred_check
      _
    $region31: #{tpu_custom_call.1} parent=1 // pred_check_branch
      %59 = sbr.rel (0) target = $region33
    $region32: #{tpu_custom_call.1} parent=1 // pred_region
      %60 = dma.done [#allocation4], 128
    $region33: #{tpu_custom_call.1} parent=1 // pred_fallthru
      _
    // Predicated region
    $region34: #{tpu_custom_call.1} parent=1 // pred_check
      _
    $region35: #{tpu_custom_call.1} parent=1 // pred_check_branch
      %62 = sbr.rel (0) target = $region37
    $region36: #{tpu_custom_call.1} parent=1 // pred_region
      %63 = dma.done [#allocation6], 128
    $region37: #{tpu_custom_call.1} parent=1 // pred_fallthru
      _
    // Predicated region
    $region38: #{tpu_custom_call.1} parent=1 // pred_check
      _
    $region39: #{tpu_custom_call.1} parent=1 // pred_check_branch
      %65 = sbr.rel (0) target = $region41
    $region40: #{tpu_custom_call.1} parent=1 // pred_region
      %66 = dma.done [#allocation6], 1024
    $region41: #{tpu_custom_call.1} parent=1 // pred_fallthru
      _
    %v68 = vld [vmem:[#allocation3] sm:$0xff]
    %v69 = vpack.c.bf16 %v68, %v68
    %v70 = vld [vmem:[#allocation5] sm:$0xf]
    %v71 = vld [vmem:[#allocation5 + $0x4] sm:$0xf]
    %v72 = vld [vmem:[%s2] sm:$0x1]
    %v74 = vlaneseq
    %v75 = vshrl.u32 %v74, 7
    %v76 = vsub.s32 0, %v75
    %v77 = vrot.slane %v72, %v76
    %v81 = vunpack.c.l.b16 %v70
    %v82 = vunpack.c.l.b16 %v71
    %v83 = vpack.c.b16 %v82, %v81
    %vm85 = vcmask 130048
    %v87 = vsel %vm85, %v69, 0
    %89 = vmatprep.subr.bf16.mxu0 0
    %90 = vmatpush1.bf16.msra.mxu0 %v83
    %91 = vmatprep.subr.bf16.mxu0 0
    %92 = vmatpush1.bf16.msra.mxu0 0
    %93 = vmatprep.subr.bf16.mxu0 0
    %94 = vmatpush1.bf16.msra.mxu0 0
    %95 = vmatprep.subr.bf16.mxu0 0
    %96 = vmatpush1.bf16.msra.mxu0 0
    %97 = vmatprep.subr.bf16.mxu0 0
    %98 = vmatpush1.bf16.msra.mxu0 0
    %99 = vmatprep.subr.bf16.mxu0 0
    %100 = vmatpush1.bf16.msra.mxu0 0
    %101 = vmatprep.subr.bf16.mxu0 0
    %102 = vmatpush1.bf16.msra.mxu0 0
    %103 = vmatprep.subr.bf16.mxu0 0
    %104 = vmatpush1.bf16.msra.mxu0 0
    %105 = vmatprep.subr.bf16.mxu0 0
    %106 = vmatpush1.bf16.msra.mxu0 0
    %107 = vmatprep.subr.bf16.mxu0 0
    %108 = vmatpush1.bf16.msra.mxu0 0
    %109 = vmatprep.subr.bf16.mxu0 0
    %110 = vmatpush1.bf16.msra.mxu0 0
    %111 = vmatprep.subr.bf16.mxu0 0
    %112 = vmatpush1.bf16.msra.mxu0 0
    %113 = vmatprep.subr.bf16.mxu0 0
    %114 = vmatpush1.bf16.msra.mxu0 0
    %115 = vmatprep.subr.bf16.mxu0 0
    %116 = vmatpush1.bf16.msra.mxu0 0
    %117 = vmatprep.subr.bf16.mxu0 0
    %118 = vmatpush1.bf16.msra.mxu0 0
    %119 = vmatprep.subr.bf16.mxu0 0
    %120 = vmatpush1.bf16.msra.mxu0 0
    %121 = vmatprep.mubr.bf16.mxu0 0
    %122 = vmatmul.mubr.bf16.gmra.mrb[0].mxu0 %v87
    %v123 = vpop.f32.mrb[0].mxu0
    %v124 = vadd.f32 %v77, %v123
    %v125 = vpop.f32.mrb[0].mxu0
    %v126 = vpop.f32.mrb[0].mxu0
    %v127 = vpop.f32.mrb[0].mxu0
    %128 = vdwg.mxu0
    %v129 = vmax.f32 %v124, 0.0
    %v130 = vpack.c.bf16 %v129, %v129
    %v131 = vld [vmem:[#allocation7] sm:$0xf]
    %v132 = vld [vmem:[#allocation7 + $0x4] sm:$0xf]
    %v133 = vld [vmem:[#allocation7 + $0x8] sm:$0xf]
    %v134 = vld [vmem:[#allocation7 + $0xc] sm:$0xf]
    %v135 = vld [vmem:[#allocation7 + $0x10] sm:$0xf]
    %v136 = vld [vmem:[#allocation7 + $0x14] sm:$0xf]
    %v137 = vld [vmem:[#allocation7 + $0x18] sm:$0xf]
    %v138 = vld [vmem:[#allocation7 + $0x1c] sm:$0xf]
    %v139 = vld [vmem:[#allocation7 + $0x20] sm:$0xf]
    %v140 = vld [vmem:[#allocation7 + $0x24] sm:$0xf]
    %v141 = vld [vmem:[#allocation7 + $0x28] sm:$0xf]
    %v142 = vld [vmem:[#allocation7 + $0x2c] sm:$0xf]
    %v143 = vld [vmem:[#allocation7 + $0x30] sm:$0xf]
    %v144 = vld [vmem:[#allocation7 + $0x34] sm:$0xf]
    %v145 = vld [vmem:[#allocation7 + $0x38] sm:$0xf]
    %v146 = vld [vmem:[#allocation7 + $0x3c] sm:$0xf]
    %v147 = vld [vmem:[%s4] sm:$0x1]
    %v149 = vlaneseq
    %v150 = vshrl.u32 %v149, 7
    %v151 = vsub.s32 0, %v150
    %v152 = vrot.slane %v147, %v151
    %v170 = vunpack.c.l.b16 %v131
    %v171 = vunpack.c.l.b16 %v132
    %v172 = vunpack.c.l.b16 %v133
    %v173 = vunpack.c.l.b16 %v134
    %v174 = vunpack.c.l.b16 %v135
    %v175 = vunpack.c.l.b16 %v136
    %v176 = vunpack.c.l.b16 %v137
    %v177 = vunpack.c.l.b16 %v138
    %v178 = vunpack.c.l.b16 %v139
    %v179 = vunpack.c.l.b16 %v140
    %v180 = vunpack.c.l.b16 %v141
    %v181 = vunpack.c.l.b16 %v142
    %v182 = vunpack.c.l.b16 %v143
    %v183 = vunpack.c.l.b16 %v144
    %v184 = vunpack.c.l.b16 %v145
    %v185 = vunpack.c.l.b16 %v146
    %v186 = vpack.c.b16 %v171, %v170
    %v187 = vpack.c.b16 %v173, %v172
    %v188 = vpack.c.b16 %v175, %v174
    %v189 = vpack.c.b16 %v177, %v176
    %v190 = vpack.c.b16 %v179, %v178
    %v191 = vpack.c.b16 %v181, %v180
    %v192 = vpack.c.b16 %v183, %v182
    %v193 = vpack.c.b16 %v185, %v184
    %202 = vmatprep.subr.bf16.mxu0 0
    %203 = vmatpush1.bf16.msra.mxu0 %v186
    %204 = vmatprep.subr.bf16.mxu0 0
    %205 = vmatpush1.bf16.msra.mxu0 %v187
    %206 = vmatprep.subr.bf16.mxu0 0
    %207 = vmatpush1.bf16.msra.mxu0 %v188
    %208 = vmatprep.subr.bf16.mxu0 0
    %209 = vmatpush1.bf16.msra.mxu0 %v189
    %210 = vmatprep.subr.bf16.mxu0 0
    %211 = vmatpush1.bf16.msra.mxu0 %v190
    %212 = vmatprep.subr.bf16.mxu0 0
    %213 = vmatpush1.bf16.msra.mxu0 %v191
    %214 = vmatprep.subr.bf16.mxu0 0
    %215 = vmatpush1.bf16.msra.mxu0 %v192
    %216 = vmatprep.subr.bf16.mxu0 0
    %217 = vmatpush1.bf16.msra.mxu0 %v193
    %218 = vmatprep.subr.bf16.mxu0 0
    %219 = vmatpush1.bf16.msra.mxu0 0
    %220 = vmatprep.subr.bf16.mxu0 0
    %221 = vmatpush1.bf16.msra.mxu0 0
    %222 = vmatprep.subr.bf16.mxu0 0
    %223 = vmatpush1.bf16.msra.mxu0 0
    %224 = vmatprep.subr.bf16.mxu0 0
    %225 = vmatpush1.bf16.msra.mxu0 0
    %226 = vmatprep.subr.bf16.mxu0 0
    %227 = vmatpush1.bf16.msra.mxu0 0
    %228 = vmatprep.subr.bf16.mxu0 0
    %229 = vmatpush1.bf16.msra.mxu0 0
    %230 = vmatprep.subr.bf16.mxu0 0
    %231 = vmatpush1.bf16.msra.mxu0 0
    %232 = vmatprep.subr.bf16.mxu0 0
    %233 = vmatpush1.bf16.msra.mxu0 0
    %234 = vmatprep.mubr.bf16.mxu0 0
    %235 = vmatmul.mubr.bf16.gmra.mrb[0].mxu0 %v130
    %v236 = vpop.f32.mrb[0].mxu0
    %v237 = vadd.f32 %v152, %v236
    %v238 = vpop.f32.mrb[0].mxu0
    %v239 = vpop.f32.mrb[0].mxu0
    %v240 = vpop.f32.mrb[0].mxu0
    %241 = vdwg.mxu0
    %v242 = vmax.f32 %v237, 0.0
    %v243 = vld [vmem:[%s5] sm:$0x1]
    %v245 = vlaneseq
    %v246 = vshrl.u32 %v245, 7
    %v247 = vsub.s32 0, %v246
    %v248 = vrot.slane %v243, %v247
    %v250 = vmul.f32 %v242, %v248
    %251 = vadd.xlane.f32.xlu0 %v250
    %v252 = vpop.xlane.xlu0 %251
    %v253 = vld [vmem:[#allocation2] sm:$0x1]
    %v255 = vlaneseq
    %v256 = vshrl.u32 %v255, 7
    %v257 = vsub.s32 0, %v256
    %v258 = vrot.slane %v253, %v257
    %v260 = vadd.f32 %v252, %v258
    %vm261 = vcmask 7168
    %262 = vst.msk [vmem:[%s7] sm:$0xff] %vm261, %v260
    // Predicated region
    $region42: #{tpu_custom_call.1} parent=1 // pred_check
      _
    $region43: #{tpu_custom_call.1} parent=1 // pred_check_branch
      %264 = sbr.rel (0) target = $region45
    $region44: #{tpu_custom_call.1} parent=1 // pred_region
      _
    $region45: #{tpu_custom_call.1} parent=1 // pred_fallthru
      _
    // Predicated region
    $region46: #{tpu_custom_call.1} parent=1 // pred_check
      _
    $region47: #{tpu_custom_call.1} parent=1 // pred_check_branch
      %266 = sbr.rel (0) target = $region49
    $region48: #{tpu_custom_call.1} parent=1 // pred_region
      _
    $region49: #{tpu_custom_call.1} parent=1 // pred_fallthru
      _
    %267 = vsyncpa [#allocation4], 1
    %268 = vsyncpa [#allocation6], 1

</llo_original>
